<compile_context>
chip_gen: v5e
topology: v5e:2x2
jax: 0.10.0
libtpu: 0.0.40
codegen_flags: <defaults>
</compile_context>

<pallas_src>
import functools

import jax
import jax.numpy as jnp
from jax.experimental import pallas as pl
from jax.experimental.pallas import tpu as pltpu

EPS = 1e-5


def _round_up(x, m):
    return (x + m - 1) // m * m


def coordconv_kernel(x_ref, w_ref, bias_ref, o_ref, im_ref, *, Wp, Mpad, Bt):
    # x_ref:    (Bt, Cin, Lpad)   zero-padded images, flattened row-major with
    #                             width Wp = W+2 (padding done in the wrapper)
    # w_ref:    (Cout, 9*Cin)     conv weight * BN scale, K ordered (dy, dx, ci)
    # bias_ref: (Cout, Mpad)      coord-conv contribution * scale + BN shift
    # o_ref:    (Bt, Cout, Mpad)  flattened outputs (lane-dense minor axis)
    # im_ref:   (Bt, 9*Cin, Mpad) VMEM scratch: im2col slabs (fully overwritten)
    Cin = x_ref.shape[1]
    w = w_ref[...]
    bias = bias_ref[...]

    for bi in range(Bt):
        # Build im2col slab bi: row (dy*3+dx)*Cin + ci is padded-image channel
        # ci shifted by dy*Wp + dx along the flattened (lane) axis.  Columns
        # that land on a padding column mix adjacent rows; the wrapper discards
        # those columns.
        for dy in range(3):
            for dx in range(3):
                tap = dy * 3 + dx
                off = dy * Wp + dx
                im_ref[bi, tap * Cin:(tap + 1) * Cin, :] = x_ref[bi, :, off:off + Mpad]

        # One fused (Cout, 9*Cin) @ (9*Cin, Mpad) matmul with f32 accumulation
        # per batch element; BN (scale folded into w) + coord bias + ReLU fused.
        acc = jnp.dot(w, im_ref[bi], preferred_element_type=jnp.float32)
        o_ref[bi] = jnp.maximum(acc + bias, 0.0).astype(o_ref.dtype)


def coordconv_forward(x_nchw, w_oihw, gamma, beta, run_mean, run_var, *,
                      compute_dtype=jnp.float32, block_b=None):
    """x_nchw: (B, Cin, H, W); w_oihw: (Cout, Cin+2, 3, 3). Returns (B, Cout, H, W)."""
    B, Cin, H, W = x_nchw.shape
    Cout, Cin2, KH, KW = w_oihw.shape
    assert Cin2 == Cin + 2 and KH == 3 and KW == 3

    Hp, Wp = H + 2, W + 2
    M = H * Wp                                   # flat output length (incl. 2 pad cols/row)
    Mpad = _round_up(M, 128)                     # lane-dense minor axis
    Lpad = _round_up(Mpad + 2 * Wp + 2, 128)     # flat input length covering max tap shift
    assert Lpad >= Mpad + 2 * Wp + 2             # im2col max-read bound (re-check if padding changes)

    if block_b is None:
        # Whole batch per step while it is small (per-step overhead dominates);
        # otherwise the largest divisor <= B//2 so >=2 grid steps remain and
        # input DMA still overlaps compute.
        if B <= 4:
            block_b = B
        else:
            block_b = max(d for d in range(1, B // 2 + 1) if B % d == 0)
    assert B % block_b == 0
    Bt = block_b
    nb = B // Bt

    xf = x_nchw.astype(jnp.float32)
    wf = w_oihw.astype(jnp.float32)

    # Fused BatchNorm (inference) scale / shift.
    scale = gamma / jnp.sqrt(run_var + EPS)
    shift = beta - run_mean * scale

    # Zero-pad (padding=1) once in the wrapper and flatten (H+2, W+2) row-major.
    x_pad = jnp.pad(xf, ((0, 0), (0, 0), (1, 1), (1, 1)))
    x_flat = x_pad.reshape(B, Cin, Hp * Wp)
    x_flat = jnp.pad(x_flat, ((0, 0), (0, 0), (0, Lpad - Hp * Wp)))
    x_flat = x_flat.astype(compute_dtype)

    # Image-channel weight, K ordered (dy, dx, ci); BN scale folded in.
    w_img = jnp.transpose(wf[:, :Cin], (0, 2, 3, 1)).reshape(Cout, 9 * Cin)
    w_img = (w_img * scale[:, None]).astype(compute_dtype)

    # Coordinate-channel contribution is batch independent: precompute with XLA
    # and fold (together with the BN shift) into a per-position bias map.
    # jnp.linspace matches torch.linspace (incl. degenerate H==1 / W==1).
    xs = jnp.linspace(-1.0, 1.0, W)
    ys = jnp.linspace(-1.0, 1.0, H)
    yy, xx = jnp.meshgrid(ys, xs, indexing="ij")
    coords = jnp.stack([xx, yy])[None].astype(jnp.float32)          # (1, 2, H, W)
    coord_out = jax.lax.conv_general_dilated(
        coords, wf[:, Cin:], window_strides=(1, 1), padding=((1, 1), (1, 1)),
        dimension_numbers=("NCHW", "OIHW", "NCHW"))[0]              # (Cout, H, W)
    bias_map = coord_out * scale[:, None, None] + shift[:, None, None]
    bias_flat = jnp.pad(bias_map, ((0, 0), (0, 0), (0, 2))).reshape(Cout, M)
    bias_flat = jnp.pad(bias_flat, ((0, 0), (0, Mpad - M)))          # (Cout, Mpad), f32

    kernel = functools.partial(coordconv_kernel, Wp=Wp, Mpad=Mpad, Bt=Bt)

    in_bytes = jnp.dtype(compute_dtype).itemsize
    vmem_bytes = (2 * Bt * Cin * Lpad * in_bytes          # input double buffer
                  + 2 * Cout * 9 * Cin * in_bytes         # weight (double-buffered)
                  + 2 * Cout * Mpad * 4                   # bias (double-buffered)
                  + 2 * Bt * Cout * Mpad * 4              # output double buffer
                  + Bt * 9 * Cin * Mpad * in_bytes)       # im2col scratch
    vmem_limit = int(min(64 * 1024 * 1024, max(32 * 1024 * 1024, 2 * vmem_bytes)))

    out_flat = pl.pallas_call(
        kernel,
        out_shape=jax.ShapeDtypeStruct((B, Cout, Mpad), jnp.float32),
        grid_spec=pltpu.PrefetchScalarGridSpec(
            num_scalar_prefetch=0,
            grid=(nb,),
            in_specs=[
                pl.BlockSpec((Bt, Cin, Lpad), lambda b: (b, 0, 0)),
                pl.BlockSpec((Cout, 9 * Cin), lambda b: (0, 0)),
                pl.BlockSpec((Cout, Mpad), lambda b: (0, 0)),
            ],
            out_specs=pl.BlockSpec((Bt, Cout, Mpad), lambda b: (b, 0, 0)),
            scratch_shapes=[pltpu.VMEM((Bt, 9 * Cin, Mpad), compute_dtype)],
        ),
        compiler_params=pltpu.CompilerParams(
            dimension_semantics=("parallel",),
            vmem_limit_bytes=vmem_limit,
        ),
        cost_estimate=pl.CostEstimate(
            flops=2 * B * Cout * 9 * Cin * Mpad,
            transcendentals=0,
            bytes_accessed=(B * Cin * Lpad * in_bytes + Cout * 9 * Cin * in_bytes
                            + Cout * Mpad * 4 + B * Cout * Mpad * 4),
        ),
    )(x_flat, w_img, bias_flat)

    # (B, Cout, Mpad) -> (B, Cout, H, W): drop the lane padding and the two
    # garbage columns per row from flattening the padded width.  No transpose.
    out = out_flat[:, :, :M].reshape(B, Cout, H, Wp)[..., :W]
    return out


def reference_coordconv(x, w, gamma, beta, run_mean, run_var):
    """Pure-JAX reference mirroring the PyTorch forward (BN in eval mode)."""
    B, Cin, H, W = x.shape
    xr = jnp.linspace(-1.0, 1.0, W)
    yr = jnp.linspace(-1.0, 1.0, H)
    yy, xx = jnp.meshgrid(yr, xr, indexing="ij")
    cx = jnp.broadcast_to(xx[None, None], (B, 1, H, W))
    cy = jnp.broadcast_to(yy[None, None], (B, 1, H, W))
    xin = jnp.concatenate([x, cx, cy], axis=1)
    out = jax.lax.conv_general_dilated(
        xin, w, window_strides=(1, 1), padding=((1, 1), (1, 1)),
        dimension_numbers=("NCHW", "OIHW", "NCHW"))
    scale = gamma / jnp.sqrt(run_var + EPS)
    shift = beta - run_mean * scale
    out = out * scale[None, :, None, None] + shift[None, :, None, None]
    return jnp.maximum(out, 0.0)


if __name__ == "__main__":
    key = jax.random.PRNGKey(0)
    kx, kw, kg, kb, km, kv = jax.random.split(key, 6)

    B, Cin, H, W, Cout = 2, 4, 16, 16, 8
    x = jax.random.normal(kx, (B, Cin, H, W), jnp.float32)
    # Conv2d weight: (out_channels, in_channels + 2, 3, 3), no bias.
    w = jax.random.normal(kw, (Cout, Cin + 2, 3, 3), jnp.float32) * 0.1
    # BatchNorm2d parameters / running stats (deterministic, nontrivial).
    gamma = jax.random.uniform(kg, (Cout,), jnp.float32, 0.5, 1.5)
    beta = jax.random.normal(kb, (Cout,), jnp.float32) * 0.1
    run_mean = jax.random.normal(km, (Cout,), jnp.float32) * 0.1
    run_var = jax.random.uniform(kv, (Cout,), jnp.float32, 0.5, 1.5)

    ref = reference_coordconv(x, w, gamma, beta, run_mean, run_var)

    # f32 data path (tight verification).
    out = coordconv_forward(x, w, gamma, beta, run_mean, run_var)
    out = jax.block_until_ready(out)
    assert out.shape == (B, Cout, H, W), out.shape
    max_err = float(jnp.max(jnp.abs(out - ref)))
    assert jnp.allclose(out, ref, rtol=2e-4, atol=2e-4), f"f32 max_err={max_err}"

    # bf16 data path (halves HBM/VMEM traffic on v6e/v7x; f32 MXU accumulation).
    out_bf16 = coordconv_forward(x, w, gamma, beta, run_mean, run_var,
                                 compute_dtype=jnp.bfloat16)
    out_bf16 = jax.block_until_ready(out_bf16)
    max_err_bf16 = float(jnp.max(jnp.abs(out_bf16 - ref)))
    assert jnp.allclose(out_bf16, ref, rtol=5e-2, atol=5e-2), f"bf16 max_err={max_err_bf16}"

    print("KERNEL_OK")
</pallas_src>

<mosaic_0001>
module attributes {stable_mosaic.version = 11 : i64} {
  func.func @coordconv_kernel(%arg0: i32, %arg1: memref<2x4x512xf32, #tpu.memory_space<vmem>>, %arg2: memref<8x36xf32, #tpu.memory_space<vmem>>, %arg3: memref<8x384xf32, #tpu.memory_space<vmem>>, %arg4: memref<2x8x384xf32, #tpu.memory_space<vmem>>, %arg5: memref<2x36x384xf32, #tpu.memory_space<vmem>>) attributes {dimension_semantics = [#tpu.dimension_semantics<parallel>], iteration_bounds = array<i64: 1>, scalar_prefetch = 0 : i64, scratch_operands = 1 : i64, tpu.core_type = #tpu.core_type<tc>, window_params = [{transform_indices = @transform_0, window_bounds = array<i64: 2, 4, 512>}, {pipeline_mode = #tpu.pipeline_mode<synchronous>, transform_indices = @transform_1, window_bounds = array<i64: 8, 36>}, {pipeline_mode = #tpu.pipeline_mode<synchronous>, transform_indices = @transform_2, window_bounds = array<i64: 8, 384>}, {transform_indices = @transform_3, window_bounds = array<i64: 2, 8, 384>}]} {
    %c0 = arith.constant 0 : index
    %c0_0 = arith.constant 0 : index
    %0 = vector.load %arg2[%c0, %c0_0] : memref<8x36xf32, #tpu.memory_space<vmem>>, vector<8x36xf32>
    %c0_1 = arith.constant 0 : index
    %c0_2 = arith.constant 0 : index
    %1 = vector.load %arg3[%c0_1, %c0_2] : memref<8x384xf32, #tpu.memory_space<vmem>>, vector<8x384xf32>
    %c0_3 = arith.constant 0 : index
    %c0_4 = arith.constant 0 : index
    %c0_5 = arith.constant 0 : index
    %2 = vector.load %arg1[%c0_3, %c0_4, %c0_5] : memref<2x4x512xf32, #tpu.memory_space<vmem>>, vector<1x4x384xf32>
    %3 = vector.shape_cast %2 : vector<1x4x384xf32> to vector<4x384xf32>
    %c0_6 = arith.constant 0 : index
    %c0_7 = arith.constant 0 : index
    %c0_8 = arith.constant 0 : index
    %4 = vector.load %arg5[%c0_6, %c0_7, %c0_8] : memref<2x36x384xf32, #tpu.memory_space<vmem>>, vector<1x4x384xf32>
    %5 = vector.shape_cast %4 : vector<1x4x384xf32> to vector<4x384xf32>
    %6 = vector.shape_cast %3 : vector<4x384xf32> to vector<1x4x384xf32>
    tpu.vector_store %arg5[%c0_6, %c0_7, %c0_8], %6 {strides = array<i32>} : memref<2x36x384xf32, #tpu.memory_space<vmem>>, vector<1x4x384xf32>,
    %c0_9 = arith.constant 0 : index
    %c0_10 = arith.constant 0 : index
    %c1 = arith.constant 1 : index
    %7 = vector.load %arg1[%c0_9, %c0_10, %c1] : memref<2x4x512xf32, #tpu.memory_space<vmem>>, vector<1x4x384xf32>
    %8 = vector.shape_cast %7 : vector<1x4x384xf32> to vector<4x384xf32>
    %c0_11 = arith.constant 0 : index
    %c4 = arith.constant 4 : index
    %c0_12 = arith.constant 0 : index
    %9 = vector.load %arg5[%c0_11, %c4, %c0_12] : memref<2x36x384xf32, #tpu.memory_space<vmem>>, vector<1x4x384xf32>
    %10 = vector.shape_cast %9 : vector<1x4x384xf32> to vector<4x384xf32>
    %11 = vector.shape_cast %8 : vector<4x384xf32> to vector<1x4x384xf32>
    tpu.vector_store %arg5[%c0_11, %c4, %c0_12], %11 {strides = array<i32>} : memref<2x36x384xf32, #tpu.memory_space<vmem>>, vector<1x4x384xf32>,
    %c0_13 = arith.constant 0 : index
    %c0_14 = arith.constant 0 : index
    %c2 = arith.constant 2 : index
    %12 = vector.load %arg1[%c0_13, %c0_14, %c2] : memref<2x4x512xf32, #tpu.memory_space<vmem>>, vector<1x4x384xf32>
    %13 = vector.shape_cast %12 : vector<1x4x384xf32> to vector<4x384xf32>
    %c0_15 = arith.constant 0 : index
    %c8 = arith.constant 8 : index
    %c0_16 = arith.constant 0 : index
    %14 = vector.load %arg5[%c0_15, %c8, %c0_16] : memref<2x36x384xf32, #tpu.memory_space<vmem>>, vector<1x4x384xf32>
    %15 = vector.shape_cast %14 : vector<1x4x384xf32> to vector<4x384xf32>
    %16 = vector.shape_cast %13 : vector<4x384xf32> to vector<1x4x384xf32>
    tpu.vector_store %arg5[%c0_15, %c8, %c0_16], %16 {strides = array<i32>} : memref<2x36x384xf32, #tpu.memory_space<vmem>>, vector<1x4x384xf32>,
    %c0_17 = arith.constant 0 : index
    %c0_18 = arith.constant 0 : index
    %c18 = arith.constant 18 : index
    %17 = vector.load %arg1[%c0_17, %c0_18, %c18] : memref<2x4x512xf32, #tpu.memory_space<vmem>>, vector<1x4x384xf32>
    %18 = vector.shape_cast %17 : vector<1x4x384xf32> to vector<4x384xf32>
    %c0_19 = arith.constant 0 : index
    %c12 = arith.constant 12 : index
    %c0_20 = arith.constant 0 : index
    %19 = vector.load %arg5[%c0_19, %c12, %c0_20] : memref<2x36x384xf32, #tpu.memory_space<vmem>>, vector<1x4x384xf32>
    %20 = vector.shape_cast %19 : vector<1x4x384xf32> to vector<4x384xf32>
    %21 = vector.shape_cast %18 : vector<4x384xf32> to vector<1x4x384xf32>
    tpu.vector_store %arg5[%c0_19, %c12, %c0_20], %21 {strides = array<i32>} : memref<2x36x384xf32, #tpu.memory_space<vmem>>, vector<1x4x384xf32>,
    %c0_21 = arith.constant 0 : index
    %c0_22 = arith.constant 0 : index
    %c19 = arith.constant 19 : index
    %22 = vector.load %arg1[%c0_21, %c0_22, %c19] : memref<2x4x512xf32, #tpu.memory_space<vmem>>, vector<1x4x384xf32>
    %23 = vector.shape_cast %22 : vector<1x4x384xf32> to vector<4x384xf32>
    %c0_23 = arith.constant 0 : index
    %c16 = arith.constant 16 : index
    %c0_24 = arith.constant 0 : index
    %24 = vector.load %arg5[%c0_23, %c16, %c0_24] : memref<2x36x384xf32, #tpu.memory_space<vmem>>, vector<1x4x384xf32>
    %25 = vector.shape_cast %24 : vector<1x4x384xf32> to vector<4x384xf32>
    %26 = vector.shape_cast %23 : vector<4x384xf32> to vector<1x4x384xf32>
    tpu.vector_store %arg5[%c0_23, %c16, %c0_24], %26 {strides = array<i32>} : memref<2x36x384xf32, #tpu.memory_space<vmem>>, vector<1x4x384xf32>,
    %c0_25 = arith.constant 0 : index
    %c0_26 = arith.constant 0 : index
    %c20 = arith.constant 20 : index
    %27 = vector.load %arg1[%c0_25, %c0_26, %c20] : memref<2x4x512xf32, #tpu.memory_space<vmem>>, vector<1x4x384xf32>
    %28 = vector.shape_cast %27 : vector<1x4x384xf32> to vector<4x384xf32>
    %c0_27 = arith.constant 0 : index
    %c20_28 = arith.constant 20 : index
    %c0_29 = arith.constant 0 : index
    %29 = vector.load %arg5[%c0_27, %c20_28, %c0_29] : memref<2x36x384xf32, #tpu.memory_space<vmem>>, vector<1x4x384xf32>
    %30 = vector.shape_cast %29 : vector<1x4x384xf32> to vector<4x384xf32>
    %31 = vector.shape_cast %28 : vector<4x384xf32> to vector<1x4x384xf32>
    tpu.vector_store %arg5[%c0_27, %c20_28, %c0_29], %31 {strides = array<i32>} : memref<2x36x384xf32, #tpu.memory_space<vmem>>, vector<1x4x384xf32>,
    %c0_30 = arith.constant 0 : index
    %c0_31 = arith.constant 0 : index
    %c36 = arith.constant 36 : index
    %32 = vector.load %arg1[%c0_30, %c0_31, %c36] : memref<2x4x512xf32, #tpu.memory_space<vmem>>, vector<1x4x384xf32>
    %33 = vector.shape_cast %32 : vector<1x4x384xf32> to vector<4x384xf32>
    %c0_32 = arith.constant 0 : index
    %c24 = arith.constant 24 : index
    %c0_33 = arith.constant 0 : index
    %34 = vector.load %arg5[%c0_32, %c24, %c0_33] : memref<2x36x384xf32, #tpu.memory_space<vmem>>, vector<1x4x384xf32>
    %35 = vector.shape_cast %34 : vector<1x4x384xf32> to vector<4x384xf32>
    %36 = vector.shape_cast %33 : vector<4x384xf32> to vector<1x4x384xf32>
    tpu.vector_store %arg5[%c0_32, %c24, %c0_33], %36 {strides = array<i32>} : memref<2x36x384xf32, #tpu.memory_space<vmem>>, vector<1x4x384xf32>,
    %c0_34 = arith.constant 0 : index
    %c0_35 = arith.constant 0 : index
    %c37 = arith.constant 37 : index
    %37 = vector.load %arg1[%c0_34, %c0_35, %c37] : memref<2x4x512xf32, #tpu.memory_space<vmem>>, vector<1x4x384xf32>
    %38 = vector.shape_cast %37 : vector<1x4x384xf32> to vector<4x384xf32>
    %c0_36 = arith.constant 0 : index
    %c28 = arith.constant 28 : index
    %c0_37 = arith.constant 0 : index
    %39 = vector.load %arg5[%c0_36, %c28, %c0_37] : memref<2x36x384xf32, #tpu.memory_space<vmem>>, vector<1x4x384xf32>
    %40 = vector.shape_cast %39 : vector<1x4x384xf32> to vector<4x384xf32>
    %41 = vector.shape_cast %38 : vector<4x384xf32> to vector<1x4x384xf32>
    tpu.vector_store %arg5[%c0_36, %c28, %c0_37], %41 {strides = array<i32>} : memref<2x36x384xf32, #tpu.memory_space<vmem>>, vector<1x4x384xf32>,
    %c0_38 = arith.constant 0 : index
    %c0_39 = arith.constant 0 : index
    %c38 = arith.constant 38 : index
    %42 = vector.load %arg1[%c0_38, %c0_39, %c38] : memref<2x4x512xf32, #tpu.memory_space<vmem>>, vector<1x4x384xf32>
    %43 = vector.shape_cast %42 : vector<1x4x384xf32> to vector<4x384xf32>
    %c0_40 = arith.constant 0 : index
    %c32 = arith.constant 32 : index
    %c0_41 = arith.constant 0 : index
    %44 = vector.load %arg5[%c0_40, %c32, %c0_41] : memref<2x36x384xf32, #tpu.memory_space<vmem>>, vector<1x4x384xf32>
    %45 = vector.shape_cast %44 : vector<1x4x384xf32> to vector<4x384xf32>
    %46 = vector.shape_cast %43 : vector<4x384xf32> to vector<1x4x384xf32>
    tpu.vector_store %arg5[%c0_40, %c32, %c0_41], %46 {strides = array<i32>} : memref<2x36x384xf32, #tpu.memory_space<vmem>>, vector<1x4x384xf32>,
    %c0_42 = arith.constant 0 : index
    %c0_43 = arith.constant 0 : index
    %c0_44 = arith.constant 0 : index
    %47 = vector.load %arg5[%c0_42, %c0_43, %c0_44] : memref<2x36x384xf32, #tpu.memory_space<vmem>>, vector<1x36x384xf32>
    %48 = vector.shape_cast %47 : vector<1x36x384xf32> to vector<36x384xf32>
    %cst = arith.constant dense<0.000000e+00> : vector<8x384xf32>
    %49 = tpu.matmul %0, %48, %cst {dimension_numbers = #tpu.dot_dimension_numbers<[1], [0], [0], [1], [0, 0, 1, 1], [], []>} : vector<8x36xf32>, vector<36x384xf32>, vector<8x384xf32> -> vector<8x384xf32>
    %50 = arith.addf %49, %1 : vector<8x384xf32>
    %cst_45 = arith.constant 0.000000e+00 : f32
    %51 = vector.broadcast %cst_45 : f32 to vector<8x384xf32>
    %52 = arith.maximumf %50, %51 : vector<8x384xf32>
    %c0_46 = arith.constant 0 : index
    %c0_47 = arith.constant 0 : index
    %c0_48 = arith.constant 0 : index
    %53 = vector.load %arg4[%c0_46, %c0_47, %c0_48] : memref<2x8x384xf32, #tpu.memory_space<vmem>>, vector<1x8x384xf32>
    %54 = vector.shape_cast %53 : vector<1x8x384xf32> to vector<8x384xf32>
    %55 = vector.shape_cast %52 : vector<8x384xf32> to vector<1x8x384xf32>
    tpu.vector_store %arg4[%c0_46, %c0_47, %c0_48], %55 {strides = array<i32>} : memref<2x8x384xf32, #tpu.memory_space<vmem>>, vector<1x8x384xf32>,
    %c1_49 = arith.constant 1 : index
    %c0_50 = arith.constant 0 : index
    %c0_51 = arith.constant 0 : index
    %56 = vector.load %arg1[%c1_49, %c0_50, %c0_51] : memref<2x4x512xf32, #tpu.memory_space<vmem>>, vector<1x4x384xf32>
    %57 = vector.shape_cast %56 : vector<1x4x384xf32> to vector<4x384xf32>
    %c1_52 = arith.constant 1 : index
    %c0_53 = arith.constant 0 : index
    %c0_54 = arith.constant 0 : index
    %58 = vector.load %arg5[%c1_52, %c0_53, %c0_54] : memref<2x36x384xf32, #tpu.memory_space<vmem>>, vector<1x4x384xf32>
    %59 = vector.shape_cast %58 : vector<1x4x384xf32> to vector<4x384xf32>
    %60 = vector.shape_cast %57 : vector<4x384xf32> to vector<1x4x384xf32>
    tpu.vector_store %arg5[%c1_52, %c0_53, %c0_54], %60 {strides = array<i32>} : memref<2x36x384xf32, #tpu.memory_space<vmem>>, vector<1x4x384xf32>,
    %c1_55 = arith.constant 1 : index
    %c0_56 = arith.constant 0 : index
    %c1_57 = arith.constant 1 : index
    %61 = vector.load %arg1[%c1_55, %c0_56, %c1_57] : memref<2x4x512xf32, #tpu.memory_space<vmem>>, vector<1x4x384xf32>
    %62 = vector.shape_cast %61 : vector<1x4x384xf32> to vector<4x384xf32>
    %c1_58 = arith.constant 1 : index
    %c4_59 = arith.constant 4 : index
    %c0_60 = arith.constant 0 : index
    %63 = vector.load %arg5[%c1_58, %c4_59, %c0_60] : memref<2x36x384xf32, #tpu.memory_space<vmem>>, vector<1x4x384xf32>
    %64 = vector.shape_cast %63 : vector<1x4x384xf32> to vector<4x384xf32>
    %65 = vector.shape_cast %62 : vector<4x384xf32> to vector<1x4x384xf32>
    tpu.vector_store %arg5[%c1_58, %c4_59, %c0_60], %65 {strides = array<i32>} : memref<2x36x384xf32, #tpu.memory_space<vmem>>, vector<1x4x384xf32>,
    %c1_61 = arith.constant 1 : index
    %c0_62 = arith.constant 0 : index
    %c2_63 = arith.constant 2 : index
    %66 = vector.load %arg1[%c1_61, %c0_62, %c2_63] : memref<2x4x512xf32, #tpu.memory_space<vmem>>, vector<1x4x384xf32>
    %67 = vector.shape_cast %66 : vector<1x4x384xf32> to vector<4x384xf32>
    %c1_64 = arith.constant 1 : index
    %c8_65 = arith.constant 8 : index
    %c0_66 = arith.constant 0 : index
    %68 = vector.load %arg5[%c1_64, %c8_65, %c0_66] : memref<2x36x384xf32, #tpu.memory_space<vmem>>, vector<1x4x384xf32>
    %69 = vector.shape_cast %68 : vector<1x4x384xf32> to vector<4x384xf32>
    %70 = vector.shape_cast %67 : vector<4x384xf32> to vector<1x4x384xf32>
    tpu.vector_store %arg5[%c1_64, %c8_65, %c0_66], %70 {strides = array<i32>} : memref<2x36x384xf32, #tpu.memory_space<vmem>>, vector<1x4x384xf32>,
    %c1_67 = arith.constant 1 : index
    %c0_68 = arith.constant 0 : index
    %c18_69 = arith.constant 18 : index
    %71 = vector.load %arg1[%c1_67, %c0_68, %c18_69] : memref<2x4x512xf32, #tpu.memory_space<vmem>>, vector<1x4x384xf32>
    %72 = vector.shape_cast %71 : vector<1x4x384xf32> to vector<4x384xf32>
    %c1_70 = arith.constant 1 : index
    %c12_71 = arith.constant 12 : index
    %c0_72 = arith.constant 0 : index
    %73 = vector.load %arg5[%c1_70, %c12_71, %c0_72] : memref<2x36x384xf32, #tpu.memory_space<vmem>>, vector<1x4x384xf32>
    %74 = vector.shape_cast %73 : vector<1x4x384xf32> to vector<4x384xf32>
    %75 = vector.shape_cast %72 : vector<4x384xf32> to vector<1x4x384xf32>
    tpu.vector_store %arg5[%c1_70, %c12_71, %c0_72], %75 {strides = array<i32>} : memref<2x36x384xf32, #tpu.memory_space<vmem>>, vector<1x4x384xf32>,
    %c1_73 = arith.constant 1 : index
    %c0_74 = arith.constant 0 : index
    %c19_75 = arith.constant 19 : index
    %76 = vector.load %arg1[%c1_73, %c0_74, %c19_75] : memref<2x4x512xf32, #tpu.memory_space<vmem>>, vector<1x4x384xf32>
    %77 = vector.shape_cast %76 : vector<1x4x384xf32> to vector<4x384xf32>
    %c1_76 = arith.constant 1 : index
    %c16_77 = arith.constant 16 : index
    %c0_78 = arith.constant 0 : index
    %78 = vector.load %arg5[%c1_76, %c16_77, %c0_78] : memref<2x36x384xf32, #tpu.memory_space<vmem>>, vector<1x4x384xf32>
    %79 = vector.shape_cast %78 : vector<1x4x384xf32> to vector<4x384xf32>
    %80 = vector.shape_cast %77 : vector<4x384xf32> to vector<1x4x384xf32>
    tpu.vector_store %arg5[%c1_76, %c16_77, %c0_78], %80 {strides = array<i32>} : memref<2x36x384xf32, #tpu.memory_space<vmem>>, vector<1x4x384xf32>,
    %c1_79 = arith.constant 1 : index
    %c0_80 = arith.constant 0 : index
    %c20_81 = arith.constant 20 : index
    %81 = vector.load %arg1[%c1_79, %c0_80, %c20_81] : memref<2x4x512xf32, #tpu.memory_space<vmem>>, vector<1x4x384xf32>
    %82 = vector.shape_cast %81 : vector<1x4x384xf32> to vector<4x384xf32>
    %c1_82 = arith.constant 1 : index
    %c20_83 = arith.constant 20 : index
    %c0_84 = arith.constant 0 : index
    %83 = vector.load %arg5[%c1_82, %c20_83, %c0_84] : memref<2x36x384xf32, #tpu.memory_space<vmem>>, vector<1x4x384xf32>
    %84 = vector.shape_cast %83 : vector<1x4x384xf32> to vector<4x384xf32>
    %85 = vector.shape_cast %82 : vector<4x384xf32> to vector<1x4x384xf32>
    tpu.vector_store %arg5[%c1_82, %c20_83, %c0_84], %85 {strides = array<i32>} : memref<2x36x384xf32, #tpu.memory_space<vmem>>, vector<1x4x384xf32>,
    %c1_85 = arith.constant 1 : index
    %c0_86 = arith.constant 0 : index
    %c36_87 = arith.constant 36 : index
    %86 = vector.load %arg1[%c1_85, %c0_86, %c36_87] : memref<2x4x512xf32, #tpu.memory_space<vmem>>, vector<1x4x384xf32>
    %87 = vector.shape_cast %86 : vector<1x4x384xf32> to vector<4x384xf32>
    %c1_88 = arith.constant 1 : index
    %c24_89 = arith.constant 24 : index
    %c0_90 = arith.constant 0 : index
    %88 = vector.load %arg5[%c1_88, %c24_89, %c0_90] : memref<2x36x384xf32, #tpu.memory_space<vmem>>, vector<1x4x384xf32>
    %89 = vector.shape_cast %88 : vector<1x4x384xf32> to vector<4x384xf32>
    %90 = vector.shape_cast %87 : vector<4x384xf32> to vector<1x4x384xf32>
    tpu.vector_store %arg5[%c1_88, %c24_89, %c0_90], %90 {strides = array<i32>} : memref<2x36x384xf32, #tpu.memory_space<vmem>>, vector<1x4x384xf32>,
    %c1_91 = arith.constant 1 : index
    %c0_92 = arith.constant 0 : index
    %c37_93 = arith.constant 37 : index
    %91 = vector.load %arg1[%c1_91, %c0_92, %c37_93] : memref<2x4x512xf32, #tpu.memory_space<vmem>>, vector<1x4x384xf32>
    %92 = vector.shape_cast %91 : vector<1x4x384xf32> to vector<4x384xf32>
    %c1_94 = arith.constant 1 : index
    %c28_95 = arith.constant 28 : index
    %c0_96 = arith.constant 0 : index
    %93 = vector.load %arg5[%c1_94, %c28_95, %c0_96] : memref<2x36x384xf32, #tpu.memory_space<vmem>>, vector<1x4x384xf32>
    %94 = vector.shape_cast %93 : vector<1x4x384xf32> to vector<4x384xf32>
    %95 = vector.shape_cast %92 : vector<4x384xf32> to vector<1x4x384xf32>
    tpu.vector_store %arg5[%c1_94, %c28_95, %c0_96], %95 {strides = array<i32>} : memref<2x36x384xf32, #tpu.memory_space<vmem>>, vector<1x4x384xf32>,
    %c1_97 = arith.constant 1 : index
    %c0_98 = arith.constant 0 : index
    %c38_99 = arith.constant 38 : index
    %96 = vector.load %arg1[%c1_97, %c0_98, %c38_99] : memref<2x4x512xf32, #tpu.memory_space<vmem>>, vector<1x4x384xf32>
    %97 = vector.shape_cast %96 : vector<1x4x384xf32> to vector<4x384xf32>
    %c1_100 = arith.constant 1 : index
    %c32_101 = arith.constant 32 : index
    %c0_102 = arith.constant 0 : index
    %98 = vector.load %arg5[%c1_100, %c32_101, %c0_102] : memref<2x36x384xf32, #tpu.memory_space<vmem>>, vector<1x4x384xf32>
    %99 = vector.shape_cast %98 : vector<1x4x384xf32> to vector<4x384xf32>
    %100 = vector.shape_cast %97 : vector<4x384xf32> to vector<1x4x384xf32>
    tpu.vector_store %arg5[%c1_100, %c32_101, %c0_102], %100 {strides = array<i32>} : memref<2x36x384xf32, #tpu.memory_space<vmem>>, vector<1x4x384xf32>,
    %c1_103 = arith.constant 1 : index
    %c0_104 = arith.constant 0 : index
    %c0_105 = arith.constant 0 : index
    %101 = vector.load %arg5[%c1_103, %c0_104, %c0_105] : memref<2x36x384xf32, #tpu.memory_space<vmem>>, vector<1x36x384xf32>
    %102 = vector.shape_cast %101 : vector<1x36x384xf32> to vector<36x384xf32>
    %cst_106 = arith.constant dense<0.000000e+00> : vector<8x384xf32>
    %103 = tpu.matmul %0, %102, %cst_106 {dimension_numbers = #tpu.dot_dimension_numbers<[1], [0], [0], [1], [0, 0, 1, 1], [], []>} : vector<8x36xf32>, vector<36x384xf32>, vector<8x384xf32> -> vector<8x384xf32>
    %104 = arith.addf %103, %1 : vector<8x384xf32>
    %cst_107 = arith.constant 0.000000e+00 : f32
    %105 = vector.broadcast %cst_107 : f32 to vector<8x384xf32>
    %106 = arith.maximumf %104, %105 : vector<8x384xf32>
    %c1_108 = arith.constant 1 : index
    %c0_109 = arith.constant 0 : index
    %c0_110 = arith.constant 0 : index
    %107 = vector.load %arg4[%c1_108, %c0_109, %c0_110] : memref<2x8x384xf32, #tpu.memory_space<vmem>>, vector<1x8x384xf32>
    %108 = vector.shape_cast %107 : vector<1x8x384xf32> to vector<8x384xf32>
    %109 = vector.shape_cast %106 : vector<8x384xf32> to vector<1x8x384xf32>
    tpu.vector_store %arg4[%c1_108, %c0_109, %c0_110], %109 {strides = array<i32>} : memref<2x8x384xf32, #tpu.memory_space<vmem>>, vector<1x8x384xf32>,
    return
  }
  func.func @transform_0(%arg0: i32) -> (i32, i32, i32) {
    %c0_i32 = arith.constant 0 : i32
    %c0_i32_0 = arith.constant 0 : i32
    %c0_i32_1 = arith.constant 0 : i32
    return %arg0, %c0_i32, %c0_i32_0 : i32, i32, i32
  }
  func.func @transform_1(%arg0: i32) -> (i32, i32) {
    %c0_i32 = arith.constant 0 : i32
    %c0_i32_0 = arith.constant 0 : i32
    %c0_i32_1 = arith.constant 0 : i32
    return %c0_i32, %c0_i32_0 : i32, i32
  }
  func.func @transform_2(%arg0: i32) -> (i32, i32) {
    %c0_i32 = arith.constant 0 : i32
    %c0_i32_0 = arith.constant 0 : i32
    %c0_i32_1 = arith.constant 0 : i32
    return %c0_i32, %c0_i32_0 : i32, i32
  }
  func.func @transform_3(%arg0: i32) -> (i32, i32, i32) {
    %c0_i32 = arith.constant 0 : i32
    %c0_i32_0 = arith.constant 0 : i32
    %c0_i32_1 = arith.constant 0 : i32
    return %arg0, %c0_i32, %c0_i32_0 : i32, i32, i32
  }
}

</mosaic_0001>

<llo_original>
// kernel: tpu_custom_call.1
$region0: #{tpu_custom_call.1}
  #allocation0 [shape = 'u32[]', space=smem, size = 0x4, offset = 0x4, fixed_abs, tag = 'smem constant byte address 0x4 - core index']
  #allocation1 [shape = 'u32[72,128]{1,0:T(1,128)}', space=vmem, size = 0x9000, scoped, tag = 'internal scratch']
  #allocation2 [shape = 'f32[2,36,384]{2,1,0:T(8,128)}', space=vmem, size = 0x1e000, scoped, tag = 'scratch operand']
  %s0 = inlined_call_operand.hbm [shape: f32[2,4,512], index: 0, kind: input, shape index: {}]
  %s1 = inlined_call_operand.hbm [shape: f32[8,36], index: 1, kind: input, shape index: {}]
  %s2 = inlined_call_operand.hbm [shape: f32[8,384], index: 2, kind: input, shape index: {}]
  %s3 = inlined_call_operand.hbm [shape: f32[2,8,384], index: 3, kind: output, shape index: {}]
  %s4 = sld [smem:[#allocation0]]
  $region34: #{tpu_custom_call.1} parent=0
    _
  %s6 = ssub.s32 1, %s4
  %s7 = scalar_select 0, %s6, %s4
  $region1: #{tpu_custom_call.1} parent=0
    #allocation3 [shape = 'u8[16384]{0}', space=vmem, size = 0x4000, scoped, tag = 'input window, operand 0, single buffered']
    #allocation4 [shape = 's32[1]{0}', space=sflag, size = 0x4, scoped, tag = 'scoped memory for tpu_custom_call.1']
    #allocation5 [shape = 's32[1]{0}', space=sflag, size = 0x4, scoped, tag = 'scoped memory for tpu_custom_call.1']
    #allocation6 [shape = 'u8[4096]{0}', space=vmem, size = 0x1000, scoped, tag = 'input window, operand 1, single buffered']
    #allocation7 [shape = 's32[1]{0}', space=sflag, size = 0x4, scoped, tag = 'scoped memory for tpu_custom_call.1']
    #allocation8 [shape = 'u8[12288]{0}', space=vmem, size = 0x3000, scoped, tag = 'input window, operand 2, single buffered']
    #allocation9 [shape = 'u8[24576]{0}', space=vmem, size = 0x6000, scoped, tag = 'output window, operand 0, single buffered']
    %8 = vsyncpa [#allocation4], 0
    %9 = vsyncpa [#allocation7], 0
    %10 = vsyncpa [#allocation5], 0
    // Predicated region
    $region2: #{tpu_custom_call.1} parent=1 // pred_check
      _
    $region3: #{tpu_custom_call.1} parent=1 // pred_check_branch
      %12 = sbr.rel (0) target = $region5
    $region4: #{tpu_custom_call.1} parent=1 // pred_region
      %14 = vsyncadd [#allocation4], 0
      %s15 = sshll.u32 %s0, 4
      %s16 = int_to_ptr.hbm [resolvable:$true] %s15
      %s17 = sshll.u32 [#allocation3], 4
      %s18 = int_to_ptr.vmem [resolvable:$true] %s17
      %23 = dma.hbm_to_vmem [thread:$0]  %s16, 512, %s18, [#allocation4], 256, 256, 16
    $region5: #{tpu_custom_call.1} parent=1 // pred_fallthru
      _
    // Predicated region
    $region6: #{tpu_custom_call.1} parent=1 // pred_check
      _
    $region7: #{tpu_custom_call.1} parent=1 // pred_check_branch
      %25 = sbr.rel (0) target = $region9
    $region8: #{tpu_custom_call.1} parent=1 // pred_region
      %27 = vsyncadd [#allocation7], 0
      %s29 = sshll.u32 %s1, 4
      %s30 = int_to_ptr.hbm [resolvable:$true] %s29
      %s31 = sshll.u32 [#allocation6], 4
      %s32 = int_to_ptr.vmem [resolvable:$true] %s31
      %34 = dma.hbm_to_vmem [thread:$0]  %s30, 128, %s32, [#allocation7]
    $region9: #{tpu_custom_call.1} parent=1 // pred_fallthru
      _
    // Predicated region
    $region10: #{tpu_custom_call.1} parent=1 // pred_check
      _
    $region11: #{tpu_custom_call.1} parent=1 // pred_check_branch
      %36 = sbr.rel (0) target = $region13
    $region12: #{tpu_custom_call.1} parent=1 // pred_region
      %38 = vsyncadd [#allocation7], 0
      %s40 = sshll.u32 %s2, 4
      %s41 = int_to_ptr.hbm [resolvable:$true] %s40
      %s42 = sshll.u32 [#allocation8], 4
      %s43 = int_to_ptr.vmem [resolvable:$true] %s42
      %45 = dma.hbm_to_vmem [thread:$0]  %s41, 384, %s43, [#allocation7]
    $region13: #{tpu_custom_call.1} parent=1 // pred_fallthru
      _
    // Predicated region
    $region14: #{tpu_custom_call.1} parent=1 // pred_check
      _
    $region15: #{tpu_custom_call.1} parent=1 // pred_check_branch
      %47 = sbr.rel (0) target = $region17
    $region16: #{tpu_custom_call.1} parent=1 // pred_region
      %49 = dma.done [#allocation4], 512
    $region17: #{tpu_custom_call.1} parent=1 // pred_fallthru
      _
    // Predicated region
    $region18: #{tpu_custom_call.1} parent=1 // pred_check
      _
    $region19: #{tpu_custom_call.1} parent=1 // pred_check_branch
      %51 = sbr.rel (0) target = $region21
    $region20: #{tpu_custom_call.1} parent=1 // pred_region
      %53 = dma.done [#allocation7], 128
    $region21: #{tpu_custom_call.1} parent=1 // pred_fallthru
      _
    // Predicated region
    $region22: #{tpu_custom_call.1} parent=1 // pred_check
      _
    $region23: #{tpu_custom_call.1} parent=1 // pred_check_branch
      %55 = sbr.rel (0) target = $region25
    $region24: #{tpu_custom_call.1} parent=1 // pred_region
      %57 = dma.done [#allocation7], 384
    $region25: #{tpu_custom_call.1} parent=1 // pred_fallthru
      _
    %v58 = vld [vmem:[#allocation6] sm:$0xff]
    %v59 = vld [vmem:[#allocation8] sm:$0xff]
    %v60 = vld [vmem:[#allocation8 + $0x8] sm:$0xff]
    %v61 = vld [vmem:[#allocation8 + $0x10] sm:$0xff]
    %v62 = vld [vmem:[#allocation3] sm:$0xff]
    %v63 = vld [vmem:[#allocation3 + $0x8] sm:$0xf]
    %66 = vst [vmem:[#allocation1] ss:$2 sm:$0xff] %v62
    %s67 = scalar_lea.vmem [#allocation1], 16
    %68 = vst [vmem:[%s67] ss:$2 sm:$0xff] %v63
    %v69 = vld.sshfl [vmem:[#allocation1] sm:$0xff pattern:$0x75316420]
    %v70 = vld.sshfl [vmem:[#allocation1 + $0x8] sm:$0xff pattern:$0x75316420]
    %v71 = vld.sshfl [vmem:[#allocation1 + $0x10] sm:$0xff pattern:$0x75316420]
    %75 = vst [vmem:[#allocation2] sm:$0xf] %v69
    %76 = vst [vmem:[#allocation2 + $0x8] sm:$0xf] %v70
    %77 = vst [vmem:[#allocation2 + $0x10] sm:$0xf] %v71
    %v78 = vld [vmem:[#allocation3] sm:$0xff]
    %v79 = vld [vmem:[#allocation3 + $0x8] sm:$0xff]
    %s82 = scalar_lea.vmem [#allocation1], 1
    %83 = vst [vmem:[%s82] ss:$2 sm:$0xff] %v78
    %s84 = scalar_lea.vmem [#allocation1], 17
    %85 = vst [vmem:[%s84] ss:$2 sm:$0xff] %v79
    %v86 = vld.sshfl [vmem:[#allocation1] sm:$0xff pattern:$0x75316420]
    %v87 = vld.sshfl [vmem:[#allocation1 + $0x8] sm:$0xff pattern:$0x75316420]
    %v88 = vld.sshfl [vmem:[#allocation1 + $0x10] sm:$0xff pattern:$0x75316420]
    %v89 = vld.sshfl [vmem:[#allocation1 + $0x18] sm:$0xff pattern:$0x75316420]
    %90 = vrot.lane.b32.xlu0 %v86, 127
    %v91 = vpop.permute.xlu0 %90
    %92 = vrot.lane.b32.xlu0 %v87, 127
    %v93 = vpop.permute.xlu0 %92
    %94 = vrot.lane.b32.xlu0 %v88, 127
    %v95 = vpop.permute.xlu0 %94
    %96 = vrot.lane.b32.xlu0 %v89, 127
    %v97 = vpop.permute.xlu0 %96
    %vm98 = vcmask 1039360
    %v99 = vsel %vm98, %v91, %v93
    %v100 = vsel %vm98, %v93, %v95
    %v101 = vsel %vm98, %v95, %v97
    %105 = vst [vmem:[#allocation2] sm:$0xf0] %v99
    %106 = vst [vmem:[#allocation2 + $0x8] sm:$0xf0] %v100
    %107 = vst [vmem:[#allocation2 + $0x10] sm:$0xf0] %v101
    %v108 = vld [vmem:[#allocation3] sm:$0xff]
    %v109 = vld [vmem:[#allocation3 + $0x8] sm:$0xff]
    %112 = vst [vmem:[#allocation1] ss:$2 sm:$0xff] %v108
    %s113 = scalar_lea.vmem [#allocation1], 16
    %114 = vst [vmem:[%s113] ss:$2 sm:$0xff] %v109
    %v115 = vld.sshfl [vmem:[#allocation1] sm:$0xff pattern:$0x75316420]
    %v116 = vld.sshfl [vmem:[#allocation1 + $0x8] sm:$0xff pattern:$0x75316420]
    %v117 = vld.sshfl [vmem:[#allocation1 + $0x10] sm:$0xff pattern:$0x75316420]
    %v118 = vld.sshfl [vmem:[#allocation1 + $0x18] sm:$0xff pattern:$0x75316420]
    %119 = vrot.lane.b32.xlu0 %v115, 126
    %v120 = vpop.permute.xlu0 %119
    %121 = vrot.lane.b32.xlu0 %v116, 126
    %v122 = vpop.permute.xlu0 %121
    %123 = vrot.lane.b32.xlu0 %v117, 126
    %v124 = vpop.permute.xlu0 %123
    %125 = vrot.lane.b32.xlu0 %v118, 126
    %v126 = vpop.permute.xlu0 %125
    %vm127 = vcmask 1031168
    %v128 = vsel %vm127, %v120, %v122
    %v129 = vsel %vm127, %v122, %v124
    %v130 = vsel %vm127, %v124, %v126
    %134 = vst [vmem:[#allocation2 + $0x18] sm:$0xf] %v128
    %135 = vst [vmem:[#allocation2 + $0x20] sm:$0xf] %v129
    %136 = vst [vmem:[#allocation2 + $0x28] sm:$0xf] %v130
    %v137 = vld [vmem:[#allocation3] sm:$0xff]
    %v138 = vld [vmem:[#allocation3 + $0x8] sm:$0xff]
    %s141 = scalar_lea.vmem [#allocation1], 1
    %142 = vst [vmem:[%s141] ss:$2 sm:$0xff] %v137
    %s143 = scalar_lea.vmem [#allocation1], 17
    %144 = vst [vmem:[%s143] ss:$2 sm:$0xff] %v138
    %v145 = vld.sshfl [vmem:[#allocation1] sm:$0xff pattern:$0x75316420]
    %v146 = vld.sshfl [vmem:[#allocation1 + $0x8] sm:$0xff pattern:$0x75316420]
    %v147 = vld.sshfl [vmem:[#allocation1 + $0x10] sm:$0xff pattern:$0x75316420]
    %v148 = vld.sshfl [vmem:[#allocation1 + $0x18] sm:$0xff pattern:$0x75316420]
    %149 = vrot.lane.b32.xlu0 %v145, 110
    %v150 = vpop.permute.xlu0 %149
    %151 = vrot.lane.b32.xlu0 %v146, 110
    %v152 = vpop.permute.xlu0 %151
    %153 = vrot.lane.b32.xlu0 %v147, 110
    %v154 = vpop.permute.xlu0 %153
    %155 = vrot.lane.b32.xlu0 %v148, 110
    %v156 = vpop.permute.xlu0 %155
    %vm157 = vcmask 900096
    %v158 = vsel %vm157, %v150, %v152
    %v159 = vsel %vm157, %v152, %v154
    %v160 = vsel %vm157, %v154, %v156
    %164 = vst [vmem:[#allocation2 + $0x18] sm:$0xf0] %v158
    %165 = vst [vmem:[#allocation2 + $0x20] sm:$0xf0] %v159
    %166 = vst [vmem:[#allocation2 + $0x28] sm:$0xf0] %v160
    %v167 = vld [vmem:[#allocation3] sm:$0xff]
    %v168 = vld [vmem:[#allocation3 + $0x8] sm:$0xff]
    %171 = vst [vmem:[#allocation1] ss:$2 sm:$0xff] %v167
    %s172 = scalar_lea.vmem [#allocation1], 16
    %173 = vst [vmem:[%s172] ss:$2 sm:$0xff] %v168
    %v174 = vld.sshfl [vmem:[#allocation1] sm:$0xff pattern:$0x75316420]
    %v175 = vld.sshfl [vmem:[#allocation1 + $0x8] sm:$0xff pattern:$0x75316420]
    %v176 = vld.sshfl [vmem:[#allocation1 + $0x10] sm:$0xff pattern:$0x75316420]
    %v177 = vld.sshfl [vmem:[#allocation1 + $0x18] sm:$0xff pattern:$0x75316420]
    %178 = vrot.lane.b32.xlu0 %v174, 109
    %v179 = vpop.permute.xlu0 %178
    %180 = vrot.lane.b32.xlu0 %v175, 109
    %v181 = vpop.permute.xlu0 %180
    %182 = vrot.lane.b32.xlu0 %v176, 109
    %v183 = vpop.permute.xlu0 %182
    %184 = vrot.lane.b32.xlu0 %v177, 109
    %v185 = vpop.permute.xlu0 %184
    %vm186 = vcmask 891904
    %v187 = vsel %vm186, %v179, %v181
    %v188 = vsel %vm186, %v181, %v183
    %v189 = vsel %vm186, %v183, %v185
    %193 = vst [vmem:[#allocation2 + $0x30] sm:$0xf] %v187
    %194 = vst [vmem:[#allocation2 + $0x38] sm:$0xf] %v188
    %195 = vst [vmem:[#allocation2 + $0x40] sm:$0xf] %v189
    %v196 = vld [vmem:[#allocation3] sm:$0xff]
    %v197 = vld [vmem:[#allocation3 + $0x8] sm:$0xff]
    %s200 = scalar_lea.vmem [#allocation1], 1
    %201 = vst [vmem:[%s200] ss:$2 sm:$0xff] %v196
    %s202 = scalar_lea.vmem [#allocation1], 17
    %203 = vst [vmem:[%s202] ss:$2 sm:$0xff] %v197
    %v204 = vld.sshfl [vmem:[#allocation1] sm:$0xff pattern:$0x75316420]
    %v205 = vld.sshfl [vmem:[#allocation1 + $0x8] sm:$0xff pattern:$0x75316420]
    %v206 = vld.sshfl [vmem:[#allocation1 + $0x10] sm:$0xff pattern:$0x75316420]
    %v207 = vld.sshfl [vmem:[#allocation1 + $0x18] sm:$0xff pattern:$0x75316420]
    %208 = vrot.lane.b32.xlu0 %v204, 108
    %v209 = vpop.permute.xlu0 %208
    %210 = vrot.lane.b32.xlu0 %v205, 108
    %v211 = vpop.permute.xlu0 %210
    %212 = vrot.lane.b32.xlu0 %v206, 108
    %v213 = vpop.permute.xlu0 %212
    %214 = vrot.lane.b32.xlu0 %v207, 108
    %v215 = vpop.permute.xlu0 %214
    %vm216 = vcmask 883712
    %v217 = vsel %vm216, %v209, %v211
    %v218 = vsel %vm216, %v211, %v213
    %v219 = vsel %vm216, %v213, %v215
    %223 = vst [vmem:[#allocation2 + $0x30] sm:$0xf0] %v217
    %224 = vst [vmem:[#allocation2 + $0x38] sm:$0xf0] %v218
    %225 = vst [vmem:[#allocation2 + $0x40] sm:$0xf0] %v219
    %v226 = vld [vmem:[#allocation3] sm:$0xff]
    %v227 = vld [vmem:[#allocation3 + $0x8] sm:$0xff]
    %230 = vst [vmem:[#allocation1] ss:$2 sm:$0xff] %v226
    %s231 = scalar_lea.vmem [#allocation1], 16
    %232 = vst [vmem:[%s231] ss:$2 sm:$0xff] %v227
    %v233 = vld.sshfl [vmem:[#allocation1] sm:$0xff pattern:$0x75316420]
    %v234 = vld.sshfl [vmem:[#allocation1 + $0x8] sm:$0xff pattern:$0x75316420]
    %v235 = vld.sshfl [vmem:[#allocation1 + $0x10] sm:$0xff pattern:$0x75316420]
    %v236 = vld.sshfl [vmem:[#allocation1 + $0x18] sm:$0xff pattern:$0x75316420]
    %237 = vrot.lane.b32.xlu0 %v233, 92
    %v238 = vpop.permute.xlu0 %237
    %239 = vrot.lane.b32.xlu0 %v234, 92
    %v240 = vpop.permute.xlu0 %239
    %241 = vrot.lane.b32.xlu0 %v235, 92
    %v242 = vpop.permute.xlu0 %241
    %243 = vrot.lane.b32.xlu0 %v236, 92
    %v244 = vpop.permute.xlu0 %243
    %vm245 = vcmask 752640
    %v246 = vsel %vm245, %v238, %v240
    %v247 = vsel %vm245, %v240, %v242
    %v248 = vsel %vm245, %v242, %v244
    %252 = vst [vmem:[#allocation2 + $0x48] sm:$0xf] %v246
    %253 = vst [vmem:[#allocation2 + $0x50] sm:$0xf] %v247
    %254 = vst [vmem:[#allocation2 + $0x58] sm:$0xf] %v248
    %v255 = vld [vmem:[#allocation3] sm:$0xff]
    %v256 = vld [vmem:[#allocation3 + $0x8] sm:$0xff]
    %s259 = scalar_lea.vmem [#allocation1], 1
    %260 = vst [vmem:[%s259] ss:$2 sm:$0xff] %v255
    %s261 = scalar_lea.vmem [#allocation1], 17
    %262 = vst [vmem:[%s261] ss:$2 sm:$0xff] %v256
    %v263 = vld.sshfl [vmem:[#allocation1] sm:$0xff pattern:$0x75316420]
    %v264 = vld.sshfl [vmem:[#allocation1 + $0x8] sm:$0xff pattern:$0x75316420]
    %v265 = vld.sshfl [vmem:[#allocation1 + $0x10] sm:$0xff pattern:$0x75316420]
    %v266 = vld.sshfl [vmem:[#allocation1 + $0x18] sm:$0xff pattern:$0x75316420]
    %267 = vrot.lane.b32.xlu0 %v263, 91
    %v268 = vpop.permute.xlu0 %267
    %269 = vrot.lane.b32.xlu0 %v264, 91
    %v270 = vpop.permute.xlu0 %269
    %271 = vrot.lane.b32.xlu0 %v265, 91
    %v272 = vpop.permute.xlu0 %271
    %273 = vrot.lane.b32.xlu0 %v266, 91
    %v274 = vpop.permute.xlu0 %273
    %vm275 = vcmask 744448
    %v276 = vsel %vm275, %v268, %v270
    %v277 = vsel %vm275, %v270, %v272
    %v278 = vsel %vm275, %v272, %v274
    %282 = vst [vmem:[#allocation2 + $0x48] sm:$0xf0] %v276
    %283 = vst [vmem:[#allocation2 + $0x50] sm:$0xf0] %v277
    %284 = vst [vmem:[#allocation2 + $0x58] sm:$0xf0] %v278
    %v285 = vld [vmem:[#allocation3] sm:$0xff]
    %v286 = vld [vmem:[#allocation3 + $0x8] sm:$0xff]
    %289 = vst [vmem:[#allocation1] ss:$2 sm:$0xff] %v285
    %s290 = scalar_lea.vmem [#allocation1], 16
    %291 = vst [vmem:[%s290] ss:$2 sm:$0xff] %v286
    %v292 = vld.sshfl [vmem:[#allocation1] sm:$0xff pattern:$0x75316420]
    %v293 = vld.sshfl [vmem:[#allocation1 + $0x8] sm:$0xff pattern:$0x75316420]
    %v294 = vld.sshfl [vmem:[#allocation1 + $0x10] sm:$0xff pattern:$0x75316420]
    %v295 = vld.sshfl [vmem:[#allocation1 + $0x18] sm:$0xff pattern:$0x75316420]
    %296 = vrot.lane.b32.xlu0 %v292, 90
    %v297 = vpop.permute.xlu0 %296
    %298 = vrot.lane.b32.xlu0 %v293, 90
    %v299 = vpop.permute.xlu0 %298
    %300 = vrot.lane.b32.xlu0 %v294, 90
    %v301 = vpop.permute.xlu0 %300
    %302 = vrot.lane.b32.xlu0 %v295, 90
    %v303 = vpop.permute.xlu0 %302
    %vm304 = vcmask 736256
    %v305 = vsel %vm304, %v297, %v299
    %v306 = vsel %vm304, %v299, %v301
    %v307 = vsel %vm304, %v301, %v303
    %311 = vst [vmem:[#allocation2 + $0x60] sm:$0xf] %v305
    %312 = vst [vmem:[#allocation2 + $0x68] sm:$0xf] %v306
    %313 = vst [vmem:[#allocation2 + $0x70] sm:$0xf] %v307
    %v314 = vld [vmem:[#allocation2] sm:$0xff]
    %v315 = vld [vmem:[#allocation2 + $0x8] sm:$0xff]
    %v316 = vld [vmem:[#allocation2 + $0x10] sm:$0xff]
    %v317 = vld [vmem:[#allocation2 + $0x18] sm:$0xff]
    %v318 = vld [vmem:[#allocation2 + $0x20] sm:$0xff]
    %v319 = vld [vmem:[#allocation2 + $0x28] sm:$0xff]
    %v320 = vld [vmem:[#allocation2 + $0x30] sm:$0xff]
    %v321 = vld [vmem:[#allocation2 + $0x38] sm:$0xff]
    %v322 = vld [vmem:[#allocation2 + $0x40] sm:$0xff]
    %v323 = vld [vmem:[#allocation2 + $0x48] sm:$0xff]
    %v324 = vld [vmem:[#allocation2 + $0x50] sm:$0xff]
    %v325 = vld [vmem:[#allocation2 + $0x58] sm:$0xff]
    %v326 = vld [vmem:[#allocation2 + $0x60] sm:$0xf]
    %v327 = vld [vmem:[#allocation2 + $0x68] sm:$0xf]
    %v328 = vld [vmem:[#allocation2 + $0x70] sm:$0xf]
    %vm329 = vcmask 293888
    %v331 = vsel %vm329, %v58, 0
    %vm333 = vcmask 1043456
    %v335 = vsel %vm333, %v326, 0
    %v338 = vsel %vm333, %v327, 0
    %v341 = vsel %vm333, %v328, 0
    %343 = vmatpush.msra.mxu0 0.0
    %344 = vmatpush.msra.mxu0 0.0
    %345 = vmatpush.msra.mxu0 0.0
    %346 = vmatpush.msra.mxu0 0.0
    %347 = vmatpush.msra.mxu0 0.0
    %348 = vmatpush.msra.mxu0 0.0
    %349 = vmatpush.msra.mxu0 0.0
    %350 = vmatpush.msra.mxu0 0.0
    %351 = vmatpush.msra.mxu0 0.0
    %352 = vmatpush.msra.mxu0 0.0
    %353 = vmatpush.msra.mxu0 0.0
    %354 = vmatpush.msra.mxu0 %v335
    %355 = vmatpush.msra.mxu0 %v323
    %356 = vmatpush.msra.mxu0 %v320
    %357 = vmatpush.msra.mxu0 %v317
    %358 = vmatpush.msra.mxu0 %v314
    %359 = vmatmul.f32.gmra.mxu0 %v331
    %v360 = vpop.f32.mrf.mxu0
    %v361 = vadd.f32 %v59, %v360
    %362 = vdwg.mxu0
    %363 = vmatpush.msra.mxu0 0.0
    %364 = vmatpush.msra.mxu0 0.0
    %365 = vmatpush.msra.mxu0 0.0
    %366 = vmatpush.msra.mxu0 0.0
    %367 = vmatpush.msra.mxu0 0.0
    %368 = vmatpush.msra.mxu0 0.0
    %369 = vmatpush.msra.mxu0 0.0
    %370 = vmatpush.msra.mxu0 0.0
    %371 = vmatpush.msra.mxu0 0.0
    %372 = vmatpush.msra.mxu0 0.0
    %373 = vmatpush.msra.mxu0 0.0
    %374 = vmatpush.msra.mxu0 %v338
    %375 = vmatpush.msra.mxu0 %v324
    %376 = vmatpush.msra.mxu0 %v321
    %377 = vmatpush.msra.mxu0 %v318
    %378 = vmatpush.msra.mxu0 %v315
    %379 = vmatmul.f32.gmra.mxu0 %v331
    %v380 = vpop.f32.mrf.mxu0
    %v381 = vadd.f32 %v60, %v380
    %382 = vdwg.mxu0
    %383 = vmatpush.msra.mxu0 0.0
    %384 = vmatpush.msra.mxu0 0.0
    %385 = vmatpush.msra.mxu0 0.0
    %386 = vmatpush.msra.mxu0 0.0
    %387 = vmatpush.msra.mxu0 0.0
    %388 = vmatpush.msra.mxu0 0.0
    %389 = vmatpush.msra.mxu0 0.0
    %390 = vmatpush.msra.mxu0 0.0
    %391 = vmatpush.msra.mxu0 0.0
    %392 = vmatpush.msra.mxu0 0.0
    %393 = vmatpush.msra.mxu0 0.0
    %394 = vmatpush.msra.mxu0 %v341
    %395 = vmatpush.msra.mxu0 %v325
    %396 = vmatpush.msra.mxu0 %v322
    %397 = vmatpush.msra.mxu0 %v319
    %398 = vmatpush.msra.mxu0 %v316
    %399 = vmatmul.f32.gmra.mxu0 %v331
    %v400 = vpop.f32.mrf.mxu0
    %v401 = vadd.f32 %v61, %v400
    %402 = vdwg.mxu0
    %v403 = vmax.f32 %v361, 0.0
    %v404 = vmax.f32 %v381, 0.0
    %v405 = vmax.f32 %v401, 0.0
    %406 = vst [vmem:[#allocation9] sm:$0xff] %v403
    %407 = vst [vmem:[#allocation9 + $0x8] sm:$0xff] %v404
    %408 = vst [vmem:[#allocation9 + $0x10] sm:$0xff] %v405
    %s409 = scalar_lea.vmem [#allocation3], 16
    %v410 = vld [vmem:[%s409] sm:$0xff]
    %v411 = vld [vmem:[%s409 + $0x8] sm:$0xf]
    %414 = vst [vmem:[#allocation1] ss:$2 sm:$0xff] %v410
    %s415 = scalar_lea.vmem [#allocation1], 16
    %416 = vst [vmem:[%s415] ss:$2 sm:$0xff] %v411
    %v417 = vld.sshfl [vmem:[#allocation1] sm:$0xff pattern:$0x75316420]
    %v418 = vld.sshfl [vmem:[#allocation1 + $0x8] sm:$0xff pattern:$0x75316420]
    %v419 = vld.sshfl [vmem:[#allocation1 + $0x10] sm:$0xff pattern:$0x75316420]
    %s423 = scalar_lea.vmem [#allocation2], 120
    %424 = vst [vmem:[%s423] sm:$0xf] %v417
    %425 = vst [vmem:[%s423 + $0x8] sm:$0xf] %v418
    %426 = vst [vmem:[%s423 + $0x10] sm:$0xf] %v419
    %v427 = vld [vmem:[%s409] sm:$0xff]
    %v428 = vld [vmem:[%s409 + $0x8] sm:$0xff]
    %s431 = scalar_lea.vmem [#allocation1], 1
    %432 = vst [vmem:[%s431] ss:$2 sm:$0xff] %v427
    %s433 = scalar_lea.vmem [#allocation1], 17
    %434 = vst [vmem:[%s433] ss:$2 sm:$0xff] %v428
    %v435 = vld.sshfl [vmem:[#allocation1] sm:$0xff pattern:$0x75316420]
    %v436 = vld.sshfl [vmem:[#allocation1 + $0x8] sm:$0xff pattern:$0x75316420]
    %v437 = vld.sshfl [vmem:[#allocation1 + $0x10] sm:$0xff pattern:$0x75316420]
    %v438 = vld.sshfl [vmem:[#allocation1 + $0x18] sm:$0xff pattern:$0x75316420]
    %439 = vrot.lane.b32.xlu0 %v435, 127
    %v440 = vpop.permute.xlu0 %439
    %441 = vrot.lane.b32.xlu0 %v436, 127
    %v442 = vpop.permute.xlu0 %441
    %443 = vrot.lane.b32.xlu0 %v437, 127
    %v444 = vpop.permute.xlu0 %443
    %445 = vrot.lane.b32.xlu0 %v438, 127
    %v446 = vpop.permute.xlu0 %445
    %v447 = vsel %vm98, %v440, %v442
    %v448 = vsel %vm98, %v442, %v444
    %v449 = vsel %vm98, %v444, %v446
    %453 = vst [vmem:[%s423] sm:$0xf0] %v447
    %454 = vst [vmem:[%s423 + $0x8] sm:$0xf0] %v448
    %455 = vst [vmem:[%s423 + $0x10] sm:$0xf0] %v449
    %v456 = vld [vmem:[%s409] sm:$0xff]
    %v457 = vld [vmem:[%s409 + $0x8] sm:$0xff]
    %460 = vst [vmem:[#allocation1] ss:$2 sm:$0xff] %v456
    %s461 = scalar_lea.vmem [#allocation1], 16
    %462 = vst [vmem:[%s461] ss:$2 sm:$0xff] %v457
    %v463 = vld.sshfl [vmem:[#allocation1] sm:$0xff pattern:$0x75316420]
    %v464 = vld.sshfl [vmem:[#allocation1 + $0x8] sm:$0xff pattern:$0x75316420]
    %v465 = vld.sshfl [vmem:[#allocation1 + $0x10] sm:$0xff pattern:$0x75316420]
    %v466 = vld.sshfl [vmem:[#allocation1 + $0x18] sm:$0xff pattern:$0x75316420]
    %467 = vrot.lane.b32.xlu0 %v463, 126
    %v468 = vpop.permute.xlu0 %467
    %469 = vrot.lane.b32.xlu0 %v464, 126
    %v470 = vpop.permute.xlu0 %469
    %471 = vrot.lane.b32.xlu0 %v465, 126
    %v472 = vpop.permute.xlu0 %471
    %473 = vrot.lane.b32.xlu0 %v466, 126
    %v474 = vpop.permute.xlu0 %473
    %v475 = vsel %vm127, %v468, %v470
    %v476 = vsel %vm127, %v470, %v472
    %v477 = vsel %vm127, %v472, %v474
    %481 = vst [vmem:[%s423 + $0x18] sm:$0xf] %v475
    %482 = vst [vmem:[%s423 + $0x20] sm:$0xf] %v476
    %483 = vst [vmem:[%s423 + $0x28] sm:$0xf] %v477
    %v484 = vld [vmem:[%s409] sm:$0xff]
    %v485 = vld [vmem:[%s409 + $0x8] sm:$0xff]
    %s488 = scalar_lea.vmem [#allocation1], 1
    %489 = vst [vmem:[%s488] ss:$2 sm:$0xff] %v484
    %s490 = scalar_lea.vmem [#allocation1], 17
    %491 = vst [vmem:[%s490] ss:$2 sm:$0xff] %v485
    %v492 = vld.sshfl [vmem:[#allocation1] sm:$0xff pattern:$0x75316420]
    %v493 = vld.sshfl [vmem:[#allocation1 + $0x8] sm:$0xff pattern:$0x75316420]
    %v494 = vld.sshfl [vmem:[#allocation1 + $0x10] sm:$0xff pattern:$0x75316420]
    %v495 = vld.sshfl [vmem:[#allocation1 + $0x18] sm:$0xff pattern:$0x75316420]
    %496 = vrot.lane.b32.xlu0 %v492, 110
    %v497 = vpop.permute.xlu0 %496
    %498 = vrot.lane.b32.xlu0 %v493, 110
    %v499 = vpop.permute.xlu0 %498
    %500 = vrot.lane.b32.xlu0 %v494, 110
    %v501 = vpop.permute.xlu0 %500
    %502 = vrot.lane.b32.xlu0 %v495, 110
    %v503 = vpop.permute.xlu0 %502
    %v504 = vsel %vm157, %v497, %v499
    %v505 = vsel %vm157, %v499, %v501
    %v506 = vsel %vm157, %v501, %v503
    %510 = vst [vmem:[%s423 + $0x18] sm:$0xf0] %v504
    %511 = vst [vmem:[%s423 + $0x20] sm:$0xf0] %v505
    %512 = vst [vmem:[%s423 + $0x28] sm:$0xf0] %v506
    %v513 = vld [vmem:[%s409] sm:$0xff]
    %v514 = vld [vmem:[%s409 + $0x8] sm:$0xff]
    %517 = vst [vmem:[#allocation1] ss:$2 sm:$0xff] %v513
    %s518 = scalar_lea.vmem [#allocation1], 16
    %519 = vst [vmem:[%s518] ss:$2 sm:$0xff] %v514
    %v520 = vld.sshfl [vmem:[#allocation1] sm:$0xff pattern:$0x75316420]
    %v521 = vld.sshfl [vmem:[#allocation1 + $0x8] sm:$0xff pattern:$0x75316420]
    %v522 = vld.sshfl [vmem:[#allocation1 + $0x10] sm:$0xff pattern:$0x75316420]
    %v523 = vld.sshfl [vmem:[#allocation1 + $0x18] sm:$0xff pattern:$0x75316420]
    %524 = vrot.lane.b32.xlu0 %v520, 109
    %v525 = vpop.permute.xlu0 %524
    %526 = vrot.lane.b32.xlu0 %v521, 109
    %v527 = vpop.permute.xlu0 %526
    %528 = vrot.lane.b32.xlu0 %v522, 109
    %v529 = vpop.permute.xlu0 %528
    %530 = vrot.lane.b32.xlu0 %v523, 109
    %v531 = vpop.permute.xlu0 %530
    %v532 = vsel %vm186, %v525, %v527
    %v533 = vsel %vm186, %v527, %v529
    %v534 = vsel %vm186, %v529, %v531
    %538 = vst [vmem:[%s423 + $0x30] sm:$0xf] %v532
    %539 = vst [vmem:[%s423 + $0x38] sm:$0xf] %v533
    %540 = vst [vmem:[%s423 + $0x40] sm:$0xf] %v534
    %v541 = vld [vmem:[%s409] sm:$0xff]
    %v542 = vld [vmem:[%s409 + $0x8] sm:$0xff]
    %s545 = scalar_lea.vmem [#allocation1], 1
    %546 = vst [vmem:[%s545] ss:$2 sm:$0xff] %v541
    %s547 = scalar_lea.vmem [#allocation1], 17
    %548 = vst [vmem:[%s547] ss:$2 sm:$0xff] %v542
    %v549 = vld.sshfl [vmem:[#allocation1] sm:$0xff pattern:$0x75316420]
    %v550 = vld.sshfl [vmem:[#allocation1 + $0x8] sm:$0xff pattern:$0x75316420]
    %v551 = vld.sshfl [vmem:[#allocation1 + $0x10] sm:$0xff pattern:$0x75316420]
    %v552 = vld.sshfl [vmem:[#allocation1 + $0x18] sm:$0xff pattern:$0x75316420]
    %553 = vrot.lane.b32.xlu0 %v549, 108
    %v554 = vpop.permute.xlu0 %553
    %555 = vrot.lane.b32.xlu0 %v550, 108
    %v556 = vpop.permute.xlu0 %555
    %557 = vrot.lane.b32.xlu0 %v551, 108
    %v558 = vpop.permute.xlu0 %557
    %559 = vrot.lane.b32.xlu0 %v552, 108
    %v560 = vpop.permute.xlu0 %559
    %v561 = vsel %vm216, %v554, %v556
    %v562 = vsel %vm216, %v556, %v558
    %v563 = vsel %vm216, %v558, %v560
    %567 = vst [vmem:[%s423 + $0x30] sm:$0xf0] %v561
    %568 = vst [vmem:[%s423 + $0x38] sm:$0xf0] %v562
    %569 = vst [vmem:[%s423 + $0x40] sm:$0xf0] %v563
    %v570 = vld [vmem:[%s409] sm:$0xff]
    %v571 = vld [vmem:[%s409 + $0x8] sm:$0xff]
    %574 = vst [vmem:[#allocation1] ss:$2 sm:$0xff] %v570
    %s575 = scalar_lea.vmem [#allocation1], 16
    %576 = vst [vmem:[%s575] ss:$2 sm:$0xff] %v571
    %v577 = vld.sshfl [vmem:[#allocation1] sm:$0xff pattern:$0x75316420]
    %v578 = vld.sshfl [vmem:[#allocation1 + $0x8] sm:$0xff pattern:$0x75316420]
    %v579 = vld.sshfl [vmem:[#allocation1 + $0x10] sm:$0xff pattern:$0x75316420]
    %v580 = vld.sshfl [vmem:[#allocation1 + $0x18] sm:$0xff pattern:$0x75316420]
    %581 = vrot.lane.b32.xlu0 %v577, 92
    %v582 = vpop.permute.xlu0 %581
    %583 = vrot.lane.b32.xlu0 %v578, 92
    %v584 = vpop.permute.xlu0 %583
    %585 = vrot.lane.b32.xlu0 %v579, 92
    %v586 = vpop.permute.xlu0 %585
    %587 = vrot.lane.b32.xlu0 %v580, 92
    %v588 = vpop.permute.xlu0 %587
    %v589 = vsel %vm245, %v582, %v584
    %v590 = vsel %vm245, %v584, %v586
    %v591 = vsel %vm245, %v586, %v588
    %595 = vst [vmem:[%s423 + $0x48] sm:$0xf] %v589
    %596 = vst [vmem:[%s423 + $0x50] sm:$0xf] %v590
    %597 = vst [vmem:[%s423 + $0x58] sm:$0xf] %v591
    %v598 = vld [vmem:[%s409] sm:$0xff]
    %v599 = vld [vmem:[%s409 + $0x8] sm:$0xff]
    %s602 = scalar_lea.vmem [#allocation1], 1
    %603 = vst [vmem:[%s602] ss:$2 sm:$0xff] %v598
    %s604 = scalar_lea.vmem [#allocation1], 17
    %605 = vst [vmem:[%s604] ss:$2 sm:$0xff] %v599
    %v606 = vld.sshfl [vmem:[#allocation1] sm:$0xff pattern:$0x75316420]
    %v607 = vld.sshfl [vmem:[#allocation1 + $0x8] sm:$0xff pattern:$0x75316420]
    %v608 = vld.sshfl [vmem:[#allocation1 + $0x10] sm:$0xff pattern:$0x75316420]
    %v609 = vld.sshfl [vmem:[#allocation1 + $0x18] sm:$0xff pattern:$0x75316420]
    %610 = vrot.lane.b32.xlu0 %v606, 91
    %v611 = vpop.permute.xlu0 %610
    %612 = vrot.lane.b32.xlu0 %v607, 91
    %v613 = vpop.permute.xlu0 %612
    %614 = vrot.lane.b32.xlu0 %v608, 91
    %v615 = vpop.permute.xlu0 %614
    %616 = vrot.lane.b32.xlu0 %v609, 91
    %v617 = vpop.permute.xlu0 %616
    %v618 = vsel %vm275, %v611, %v613
    %v619 = vsel %vm275, %v613, %v615
    %v620 = vsel %vm275, %v615, %v617
    %624 = vst [vmem:[%s423 + $0x48] sm:$0xf0] %v618
    %625 = vst [vmem:[%s423 + $0x50] sm:$0xf0] %v619
    %626 = vst [vmem:[%s423 + $0x58] sm:$0xf0] %v620
    %v627 = vld [vmem:[%s409] sm:$0xff]
    %v628 = vld [vmem:[%s409 + $0x8] sm:$0xff]
    %631 = vst [vmem:[#allocation1] ss:$2 sm:$0xff] %v627
    %s632 = scalar_lea.vmem [#allocation1], 16
    %633 = vst [vmem:[%s632] ss:$2 sm:$0xff] %v628
    %v634 = vld.sshfl [vmem:[#allocation1] sm:$0xff pattern:$0x75316420]
    %v635 = vld.sshfl [vmem:[#allocation1 + $0x8] sm:$0xff pattern:$0x75316420]
    %v636 = vld.sshfl [vmem:[#allocation1 + $0x10] sm:$0xff pattern:$0x75316420]
    %v637 = vld.sshfl [vmem:[#allocation1 + $0x18] sm:$0xff pattern:$0x75316420]
    %638 = vrot.lane.b32.xlu0 %v634, 90
    %v639 = vpop.permute.xlu0 %638
    %640 = vrot.lane.b32.xlu0 %v635, 90
    %v641 = vpop.permute.xlu0 %640
    %642 = vrot.lane.b32.xlu0 %v636, 90
    %v643 = vpop.permute.xlu0 %642
    %644 = vrot.lane.b32.xlu0 %v637, 90
    %v645 = vpop.permute.xlu0 %644
    %v646 = vsel %vm304, %v639, %v641
    %v647 = vsel %vm304, %v641, %v643
    %v648 = vsel %vm304, %v643, %v645
    %652 = vst [vmem:[%s423 + $0x60] sm:$0xf] %v646
    %653 = vst [vmem:[%s423 + $0x68] sm:$0xf] %v647
    %654 = vst [vmem:[%s423 + $0x70] sm:$0xf] %v648
    %v655 = vld [vmem:[%s423] sm:$0xff]
    %v656 = vld [vmem:[%s423 + $0x8] sm:$0xff]
    %v657 = vld [vmem:[%s423 + $0x10] sm:$0xff]
    %v658 = vld [vmem:[%s423 + $0x18] sm:$0xff]
    %v659 = vld [vmem:[%s423 + $0x20] sm:$0xff]
    %v660 = vld [vmem:[%s423 + $0x28] sm:$0xff]
    %v661 = vld [vmem:[%s423 + $0x30] sm:$0xff]
    %v662 = vld [vmem:[%s423 + $0x38] sm:$0xff]
    %v663 = vld [vmem:[%s423 + $0x40] sm:$0xff]
    %v664 = vld [vmem:[%s423 + $0x48] sm:$0xff]
    %v665 = vld [vmem:[%s423 + $0x50] sm:$0xff]
    %v666 = vld [vmem:[%s423 + $0x58] sm:$0xff]
    %v667 = vld [vmem:[%s423 + $0x60] sm:$0xf]
    %v668 = vld [vmem:[%s423 + $0x68] sm:$0xf]
    %v669 = vld [vmem:[%s423 + $0x70] sm:$0xf]
    %v671 = vsel %vm333, %v667, 0
    %v674 = vsel %vm333, %v668, 0
    %v677 = vsel %vm333, %v669, 0
    %679 = vmatpush.msra.mxu0 0.0
    %680 = vmatpush.msra.mxu0 0.0
    %681 = vmatpush.msra.mxu0 0.0
    %682 = vmatpush.msra.mxu0 0.0
    %683 = vmatpush.msra.mxu0 0.0
    %684 = vmatpush.msra.mxu0 0.0
    %685 = vmatpush.msra.mxu0 0.0
    %686 = vmatpush.msra.mxu0 0.0
    %687 = vmatpush.msra.mxu0 0.0
    %688 = vmatpush.msra.mxu0 0.0
    %689 = vmatpush.msra.mxu0 0.0
    %690 = vmatpush.msra.mxu0 %v671
    %691 = vmatpush.msra.mxu0 %v664
    %692 = vmatpush.msra.mxu0 %v661
    %693 = vmatpush.msra.mxu0 %v658
    %694 = vmatpush.msra.mxu0 %v655
    %695 = vmatmul.f32.gmra.mxu0 %v331
    %v696 = vpop.f32.mrf.mxu0
    %v697 = vadd.f32 %v59, %v696
    %698 = vdwg.mxu0
    %699 = vmatpush.msra.mxu0 0.0
    %700 = vmatpush.msra.mxu0 0.0
    %701 = vmatpush.msra.mxu0 0.0
    %702 = vmatpush.msra.mxu0 0.0
    %703 = vmatpush.msra.mxu0 0.0
    %704 = vmatpush.msra.mxu0 0.0
    %705 = vmatpush.msra.mxu0 0.0
    %706 = vmatpush.msra.mxu0 0.0
    %707 = vmatpush.msra.mxu0 0.0
    %708 = vmatpush.msra.mxu0 0.0
    %709 = vmatpush.msra.mxu0 0.0
    %710 = vmatpush.msra.mxu0 %v674
    %711 = vmatpush.msra.mxu0 %v665
    %712 = vmatpush.msra.mxu0 %v662
    %713 = vmatpush.msra.mxu0 %v659
    %714 = vmatpush.msra.mxu0 %v656
    %715 = vmatmul.f32.gmra.mxu0 %v331
    %v716 = vpop.f32.mrf.mxu0
    %v717 = vadd.f32 %v60, %v716
    %718 = vdwg.mxu0
    %719 = vmatpush.msra.mxu0 0.0
    %720 = vmatpush.msra.mxu0 0.0
    %721 = vmatpush.msra.mxu0 0.0
    %722 = vmatpush.msra.mxu0 0.0
    %723 = vmatpush.msra.mxu0 0.0
    %724 = vmatpush.msra.mxu0 0.0
    %725 = vmatpush.msra.mxu0 0.0
    %726 = vmatpush.msra.mxu0 0.0
    %727 = vmatpush.msra.mxu0 0.0
    %728 = vmatpush.msra.mxu0 0.0
    %729 = vmatpush.msra.mxu0 0.0
    %730 = vmatpush.msra.mxu0 %v677
    %731 = vmatpush.msra.mxu0 %v666
    %732 = vmatpush.msra.mxu0 %v663
    %733 = vmatpush.msra.mxu0 %v660
    %734 = vmatpush.msra.mxu0 %v657
    %735 = vmatmul.f32.gmra.mxu0 %v331
    %v736 = vpop.f32.mrf.mxu0
    %v737 = vadd.f32 %v61, %v736
    %738 = vdwg.mxu0
    %v739 = vmax.f32 %v697, 0.0
    %v740 = vmax.f32 %v717, 0.0
    %v741 = vmax.f32 %v737, 0.0
    %s742 = scalar_lea.vmem [#allocation9], 24
    %743 = vst [vmem:[%s742] sm:$0xff] %v739
    %744 = vst [vmem:[%s742 + $0x8] sm:$0xff] %v740
    %745 = vst [vmem:[%s742 + $0x10] sm:$0xff] %v741
    // Predicated region
    $region26: #{tpu_custom_call.1} parent=1 // pred_check
      _
    $region27: #{tpu_custom_call.1} parent=1 // pred_check_branch
      %747 = sbr.rel (0) target = $region29
    $region28: #{tpu_custom_call.1} parent=1 // pred_region
      %749 = vsyncadd [#allocation5], 0
      %s750 = sshll.u32 [#allocation9], 4
      %s751 = int_to_ptr.vmem [resolvable:$true] %s750
      %s752 = sshll.u32 %s3, 4
      %s753 = int_to_ptr.hbm [resolvable:$true] %s752
      %758 = dma.vmem_to_hbm [thread:$0]  %s751, 768, %s753, [#allocation5], 384, 384, 24
    $region29: #{tpu_custom_call.1} parent=1 // pred_fallthru
      _
    // Predicated region
    $region30: #{tpu_custom_call.1} parent=1 // pred_check
      _
    $region31: #{tpu_custom_call.1} parent=1 // pred_check_branch
      %760 = sbr.rel (0) target = $region33
    $region32: #{tpu_custom_call.1} parent=1 // pred_region
      %762 = dma.done [#allocation5], 768
    $region33: #{tpu_custom_call.1} parent=1 // pred_fallthru
      _
    %763 = vsyncpa [#allocation4], 1
    %764 = vsyncpa [#allocation7], 1
    %765 = vsyncpa [#allocation5], 1

</llo_original>
